<compile_context>
chip_gen: v7x
topology: tpu7x:2x2x1
jax: 0.10.0
libtpu: 0.0.40
codegen_flags: <defaults>
</compile_context>

<pallas_src>
import functools

import jax
import jax.numpy as jnp
from jax import lax
from jax.experimental import pallas as pl
from jax.experimental.pallas import tpu as pltpu


def _round_up(x, m):
    return ((x + m - 1) // m) * m


def _cdiv(a, b):
    return (a + b - 1) // b


def _make_kernel(B, J, tile_b, tile_j, grid_b, mask_rows, mask_cols):
    total_rows = float(grid_b * tile_b)  # rows processed per joint column

    def kernel(inp_ref, tgt_ref, out_ref, inv_ref):
        jblk = pl.program_id(0)
        bblk = pl.program_id(1)

        @pl.when(bblk == 0)
        def _():
            out_ref[...] = jnp.zeros_like(out_ref)   # per-joint |err| sum
            inv_ref[...] = jnp.zeros_like(inv_ref)   # per-joint invalid count

        x = inp_ref[...].astype(jnp.float32)         # (tile_b, tile_j)
        t = tgt_ref[...].astype(jnp.float32)         # (tile_b, tile_j)

        invalid = jnp.isnan(t)
        # Static (trace-time) ragged-edge masking; only emitted when the tile
        # overhangs the true array.  Out-of-bounds reads return unspecified
        # data, so mask them out of both the loss and the count.
        if mask_rows:
            rows = bblk * tile_b + lax.broadcasted_iota(
                jnp.int32, (tile_b, tile_j), 0)
            invalid = invalid | (rows >= B)
        if mask_cols:
            cols = jblk * tile_j + lax.broadcasted_iota(
                jnp.int32, (tile_b, tile_j), 1)
            invalid = invalid | (cols >= J)

        loss = jnp.where(invalid, 0.0, jnp.abs(x - t))

        out_ref[...] += jnp.sum(loss, axis=0, keepdims=True)                       # (1, tile_j)
        inv_ref[...] += jnp.sum(invalid.astype(jnp.float32), axis=0, keepdims=True)  # (1, tile_j)

        @pl.when(bblk == pl.num_programs(1) - 1)
        def _():
            # count of valid examples = rows processed - invalid (NaN/OOB).
            cnt = total_rows - inv_ref[...]
            # All-invalid columns give 0/0 = NaN (matches PyTorch); padded
            # (OOB) columns are sliced off in the wrapper before the mean.
            out_ref[...] = out_ref[...] / cnt

    return kernel


def _select_tiles(B, J, itemsize):
    # Sublane granularity: 8 rows for 4-byte dtypes, 16 for bf16, etc.
    sub = max(8, (8 * 4) // itemsize)

    # Lane (joint) tiling: keep blocks lane-dense, but split into >= 2 joint
    # tiles when possible so the "parallel" grid axis can shard across the
    # two v7x TensorCores.  Cap at 2048 lanes.
    n_col_tiles = _cdiv(J, 128)
    if n_col_tiles >= 2:
        tile_j = min(((n_col_tiles + 1) // 2) * 128, 2048)
    else:
        tile_j = 128

    # Batch (sublane) tiling: ~1.5 MiB per input block is already at the HBM
    # roofline; also aim for >= ~8 batch steps so DMA fill/drain is hidden.
    budget_bytes = 3 << 19  # 1.5 MiB
    budget_rows = max(sub, ((budget_bytes // (tile_j * itemsize)) // sub) * sub)
    target_rows = _round_up(_cdiv(B, 8), sub)
    tile_b = min(budget_rows, target_rows, _round_up(B, sub))
    return tile_b, tile_j


def l1_loss_pallas(inputs, targets, *, tile_j=None, tile_b=None,
                   small_input_fallback=True):
    """Masked L1 loss: inputs/targets of shape (B, J) -> scalar (float32)."""
    B, J = inputs.shape
    assert targets.shape == (B, J)

    itemsize = max(inputs.dtype.itemsize, targets.dtype.itemsize)
    sub = max(8, (8 * 4) // itemsize)

    # Tiny problems: pallas_call dispatch/pipeline overhead dominates; let
    # XLA fuse it.
    if small_input_fallback and (B * J * itemsize) < (1 << 20):
        return l1_loss_reference(inputs, targets)

    # --- tile selection ----------------------------------------------------
    auto_tb, auto_tj = _select_tiles(B, J, itemsize)
    if tile_j is None:
        tile_j = auto_tj
    if tile_b is None:
        tile_b = auto_tb
    assert tile_j % 128 == 0
    assert tile_b % sub == 0

    grid_j = _cdiv(J, tile_j)
    grid_b = _cdiv(B, tile_b)
    grid = (grid_j, grid_b)                      # reduction (batch) axis last

    mask_rows = (B % tile_b) != 0
    mask_cols = (J % tile_j) != 0

    kernel = _make_kernel(B, J, tile_b, tile_j, grid_b, mask_rows, mask_cols)

    # --- VMEM budget: only raise the scoped limit if we would exceed it ----
    block_bytes = tile_b * tile_j * itemsize
    vmem_needed = (2 * 2 * block_bytes            # 2 inputs, double-buffered
                   + 2 * 2 * tile_j * 4           # output block, dbl-buffered
                   + tile_j * 4)                  # scratch
    compiler_kwargs = dict(dimension_semantics=("parallel", "arbitrary"))
    if vmem_needed > (12 << 20):
        compiler_kwargs["vmem_limit_bytes"] = min(
            int(vmem_needed * 1.5) + (4 << 20), 48 << 20)

    out_w = grid_j * tile_j                       # full output blocks only

    per_joint = pl.pallas_call(
        kernel,
        out_shape=jax.ShapeDtypeStruct((1, out_w), jnp.float32),
        grid_spec=pl.GridSpec(
            grid=grid,
            in_specs=[
                pl.BlockSpec((tile_b, tile_j), lambda j, b: (b, j)),
                pl.BlockSpec((tile_b, tile_j), lambda j, b: (b, j)),
            ],
            # Lane-dense per-joint output; resident across the batch axis.
            out_specs=pl.BlockSpec((1, tile_j), lambda j, b: (0, j)),
            scratch_shapes=[pltpu.VMEM((1, tile_j), jnp.float32)],
        ),
        compiler_params=pltpu.CompilerParams(**compiler_kwargs),
    )(inputs, targets)

    # Final (tiny) mean over the true joints in plain JAX.
    return jnp.mean(per_joint[0, :J])


def l1_loss_reference(inputs, targets):
    """Pure-JAX reference mirroring the PyTorch module (f32 math)."""
    x = inputs.astype(jnp.float32)
    t = targets.astype(jnp.float32)
    nan_mask = jnp.isnan(t)
    loss = jnp.where(nan_mask, 0.0, jnp.abs(x - t))
    num_per_joint = jnp.sum((~nan_mask).astype(jnp.float32), axis=0)
    mean_per_joint = jnp.sum(loss, axis=0) / num_per_joint
    return jnp.mean(mean_per_joint)


def _check(loss, ref, tol, what):
    loss = float(loss)
    ref = float(ref)
    assert jnp.isfinite(loss), f"{what}: non-finite loss {loss}"
    assert abs(loss - ref) < tol, (what, loss, ref)


if __name__ == "__main__":
    key = jax.random.PRNGKey(0)
    k_in, k_tg = jax.random.split(key)

    # TODO(synk): logger / tensorboard side-effects from the nn.Module are
    # intentionally not reproduced (host-side I/O, not a kernel concern).

    # 1) Aligned f32 case (no edge masking path).  Force the Pallas kernel.
    B, J = 8, 256
    inputs = jax.random.normal(k_in, (B, J), dtype=jnp.float32)
    targets = jax.random.normal(k_tg, (B, J), dtype=jnp.float32)
    targets = targets.at[0, ::7].set(jnp.nan)
    loss = jax.block_until_ready(
        l1_loss_pallas(inputs, targets, small_input_fallback=False))
    ref = jax.block_until_ready(l1_loss_reference(inputs, targets))
    _check(loss, ref, 1e-5, "f32 aligned")

    # 2) Ragged f32 case (row + column edge masking, no padding copies).
    B2, J2 = 5, 37
    k3, k4 = jax.random.split(k_tg)
    inp2 = jax.random.normal(k3, (B2, J2), dtype=jnp.float32)
    tgt2 = jax.random.normal(k4, (B2, J2), dtype=jnp.float32)
    tgt2 = tgt2.at[1, ::5].set(jnp.nan)
    loss2 = jax.block_until_ready(
        l1_loss_pallas(inp2, tgt2, small_input_fallback=False))
    ref2 = jax.block_until_ready(l1_loss_reference(inp2, tgt2))
    _check(loss2, ref2, 1e-5, "f32 ragged")

    # 3) bf16 inputs (no wrapper upcast; 16-row sublane tiles; multi batch
    #    step accumulation) with ragged edges.
    B3, J3 = 17, 200
    k5, k6 = jax.random.split(k4)
    inp3 = jax.random.normal(k5, (B3, J3), dtype=jnp.bfloat16)
    tgt3 = jax.random.normal(k6, (B3, J3), dtype=jnp.bfloat16)
    tgt3 = tgt3.at[0, ::7].set(jnp.nan)
    tgt3 = tgt3.at[9, ::13].set(jnp.nan)
    loss3 = jax.block_until_ready(
        l1_loss_pallas(inp3, tgt3, small_input_fallback=False))
    ref3 = jax.block_until_ready(l1_loss_reference(inp3, tgt3))
    _check(loss3, ref3, 1e-4, "bf16 ragged")

    # 4) Default path (small-input fallback) still matches.
    loss4 = jax.block_until_ready(l1_loss_pallas(inputs, targets))
    _check(loss4, ref, 1e-5, "fallback")

    print("KERNEL_OK")
</pallas_src>

<mosaic_0001>
module attributes {stable_mosaic.version = 11 : i64} {
  func.func @kernel(%arg0: i32, %arg1: i32, %arg2: memref<8x128xf32, #tpu.memory_space<vmem>>, %arg3: memref<8x128xf32, #tpu.memory_space<vmem>>, %arg4: memref<1x128xf32, #tpu.memory_space<vmem>>, %arg5: memref<1x128xf32, #tpu.memory_space<vmem>>) attributes {dimension_semantics = [#tpu.dimension_semantics<parallel>, #tpu.dimension_semantics<arbitrary>], iteration_bounds = array<i64: 2, 1>, scalar_prefetch = 0 : i64, scratch_operands = 1 : i64, tpu.core_type = #tpu.core_type<tc>, window_params = [{transform_indices = @transform_0, window_bounds = array<i64: 8, 128>}, {transform_indices = @transform_1, window_bounds = array<i64: 8, 128>}, {transform_indices = @transform_2, window_bounds = array<i64: 1, 128>}]} {
    %c0_i32 = arith.constant 0 : i32
    %0 = arith.cmpi eq, %arg1, %c0_i32 : i32
    %1 = arith.extui %0 : i1 to i32
    %c0_i32_0 = arith.constant 0 : i32
    %2 = arith.cmpi ne, %1, %c0_i32_0 : i32
    scf.if %2 {
      %cst_16 = arith.constant 0.000000e+00 : f32
      %25 = vector.broadcast %cst_16 : f32 to vector<1x128xf32>
      %c0_17 = arith.constant 0 : index
      %c0_18 = arith.constant 0 : index
      %26 = vector.load %arg4[%c0_17, %c0_18] : memref<1x128xf32, #tpu.memory_space<vmem>>, vector<1x128xf32>
      tpu.vector_store %arg4[%c0_17, %c0_18], %25 {strides = array<i32>} : memref<1x128xf32, #tpu.memory_space<vmem>>, vector<1x128xf32>,
      %cst_19 = arith.constant 0.000000e+00 : f32
      %27 = vector.broadcast %cst_19 : f32 to vector<1x128xf32>
      %c0_20 = arith.constant 0 : index
      %c0_21 = arith.constant 0 : index
      %28 = vector.load %arg5[%c0_20, %c0_21] : memref<1x128xf32, #tpu.memory_space<vmem>>, vector<1x128xf32>
      tpu.vector_store %arg5[%c0_20, %c0_21], %27 {strides = array<i32>} : memref<1x128xf32, #tpu.memory_space<vmem>>, vector<1x128xf32>,
    } else {
    }
    %c0 = arith.constant 0 : index
    %c0_1 = arith.constant 0 : index
    %3 = vector.load %arg2[%c0, %c0_1] : memref<8x128xf32, #tpu.memory_space<vmem>>, vector<8x128xf32>
    %c0_2 = arith.constant 0 : index
    %c0_3 = arith.constant 0 : index
    %4 = vector.load %arg3[%c0_2, %c0_3] : memref<8x128xf32, #tpu.memory_space<vmem>>, vector<8x128xf32>
    %5 = arith.cmpf one, %4, %4 : vector<8x128xf32>
    %6 = arith.subf %3, %4 : vector<8x128xf32>
    %7 = math.absf %6 : vector<8x128xf32>
    %cst = arith.constant 0.000000e+00 : f32
    %8 = vector.broadcast %cst : f32 to vector<8x128xf32>
    %9 = arith.select %5, %8, %7 : vector<8x128xi1>, vector<8x128xf32>
    %c0_4 = arith.constant 0 : index
    %c0_5 = arith.constant 0 : index
    %10 = vector.load %arg4[%c0_4, %c0_5] : memref<1x128xf32, #tpu.memory_space<vmem>>, vector<1x128xf32>
    %cst_6 = arith.constant dense<0.000000e+00> : vector<128xf32>
    %11 = vector.multi_reduction <add>, %9, %cst_6 [0] : vector<8x128xf32> to vector<128xf32>
    %12 = vector.shape_cast %11 : vector<128xf32> to vector<1x128xf32>
    %13 = arith.addf %10, %12 : vector<1x128xf32>
    %c0_7 = arith.constant 0 : index
    %c0_8 = arith.constant 0 : index
    %14 = vector.load %arg4[%c0_7, %c0_8] : memref<1x128xf32, #tpu.memory_space<vmem>>, vector<1x128xf32>
    tpu.vector_store %arg4[%c0_7, %c0_8], %13 {strides = array<i32>} : memref<1x128xf32, #tpu.memory_space<vmem>>, vector<1x128xf32>,
    %c0_9 = arith.constant 0 : index
    %c0_10 = arith.constant 0 : index
    %15 = vector.load %arg5[%c0_9, %c0_10] : memref<1x128xf32, #tpu.memory_space<vmem>>, vector<1x128xf32>
    %16 = arith.extui %5 : vector<8x128xi1> to vector<8x128xi32>
    %17 = arith.sitofp %16 : vector<8x128xi32> to vector<8x128xf32>
    %cst_11 = arith.constant dense<0.000000e+00> : vector<128xf32>
    %18 = vector.multi_reduction <add>, %17, %cst_11 [0] : vector<8x128xf32> to vector<128xf32>
    %19 = vector.shape_cast %18 : vector<128xf32> to vector<1x128xf32>
    %20 = arith.addf %15, %19 : vector<1x128xf32>
    %c0_12 = arith.constant 0 : index
    %c0_13 = arith.constant 0 : index
    %21 = vector.load %arg5[%c0_12, %c0_13] : memref<1x128xf32, #tpu.memory_space<vmem>>, vector<1x128xf32>
    tpu.vector_store %arg5[%c0_12, %c0_13], %20 {strides = array<i32>} : memref<1x128xf32, #tpu.memory_space<vmem>>, vector<1x128xf32>,
    %c0_i32_14 = arith.constant 0 : i32
    %22 = arith.cmpi eq, %arg1, %c0_i32_14 : i32
    %23 = arith.extui %22 : i1 to i32
    %c0_i32_15 = arith.constant 0 : i32
    %24 = arith.cmpi ne, %23, %c0_i32_15 : i32
    scf.if %24 {
      %c0_16 = arith.constant 0 : index
      %c0_17 = arith.constant 0 : index
      %25 = vector.load %arg5[%c0_16, %c0_17] : memref<1x128xf32, #tpu.memory_space<vmem>>, vector<1x128xf32>
      %cst_18 = arith.constant 8.000000e+00 : f32
      %26 = vector.broadcast %cst_18 : f32 to vector<1x128xf32>
      %27 = arith.subf %26, %25 : vector<1x128xf32>
      %c0_19 = arith.constant 0 : index
      %c0_20 = arith.constant 0 : index
      %28 = vector.load %arg4[%c0_19, %c0_20] : memref<1x128xf32, #tpu.memory_space<vmem>>, vector<1x128xf32>
      %29 = arith.divf %28, %27 : vector<1x128xf32>
      %c0_21 = arith.constant 0 : index
      %c0_22 = arith.constant 0 : index
      %30 = vector.load %arg4[%c0_21, %c0_22] : memref<1x128xf32, #tpu.memory_space<vmem>>, vector<1x128xf32>
      tpu.vector_store %arg4[%c0_21, %c0_22], %29 {strides = array<i32>} : memref<1x128xf32, #tpu.memory_space<vmem>>, vector<1x128xf32>,
    } else {
    }
    return
  }
  func.func @transform_0(%arg0: i32, %arg1: i32) -> (i32, i32) {
    %c0_i32 = arith.constant 0 : i32
    return %arg1, %arg0 : i32, i32
  }
  func.func @transform_1(%arg0: i32, %arg1: i32) -> (i32, i32) {
    %c0_i32 = arith.constant 0 : i32
    return %arg1, %arg0 : i32, i32
  }
  func.func @transform_2(%arg0: i32, %arg1: i32) -> (i32, i32) {
    %c0_i32 = arith.constant 0 : i32
    %c0_i32_0 = arith.constant 0 : i32
    return %c0_i32, %arg0 : i32, i32
  }
}

</mosaic_0001>

<llo_original>
// kernel: tpu_custom_call.1
$region0: #{tpu_custom_call.1}
  #allocation0 [shape = 'u32[]', space=smem, size = 0x4, offset = 0x4, fixed_abs, tag = 'smem constant byte address 0x4 - core index']
  #allocation1 [shape = 'u32[144,128]{1,0:T(1,128)}', space=vmem, size = 0x12000, scoped, tag = 'internal scratch']
  #allocation2 [shape = 'f32[1,128]{1,0:T(1,128)}', space=vmem, size = 0x200, scoped, tag = 'scratch operand']
  %s0 = inlined_call_operand.hbm [shape: f32[8,256], index: 0, kind: input, shape index: {}]
  %s1 = inlined_call_operand.hbm [shape: f32[8,256], index: 1, kind: input, shape index: {}]
  %s2 = inlined_call_operand.hbm [shape: f32[1,256], index: 2, kind: output, shape index: {}]
  %s3 = sld [smem:[#allocation0]]
  $region57: #{tpu_custom_call.1} parent=0
    _
  %s5 = ssub.s32 1, %s3
  %s6 = scalar_select 0, %s5, %s3
  $region1: #{tpu_custom_call.1} parent=0
    #allocation3 [shape = 'u8[8192]{0}', space=vmem, size = 0x2000, scoped, tag = 'input window, operand 0']
    #allocation4 [shape = 's32[2]{0}', space=sflag, size = 0x8, scoped, tag = 'scoped memory for tpu_custom_call.1']
    #allocation5 [shape = 's32[2]{0}', space=sflag, size = 0x8, scoped, tag = 'scoped memory for tpu_custom_call.1']
    #allocation6 [shape = 'u8[8192]{0}', space=vmem, size = 0x2000, scoped, tag = 'input window, operand 1']
    #allocation7 [shape = 's32[2]{0}', space=sflag, size = 0x8, scoped, tag = 'scoped memory for tpu_custom_call.1']
    #allocation8 [shape = 'u8[1024]{0}', space=vmem, size = 0x400, scoped, tag = 'output window, operand 0']
    %7 = vsyncpa [#allocation4], 0
    %s8 = scalar_lea.sflag [#allocation4], 1
    %9 = vsyncpa %s8, 0
    %10 = vsyncpa [#allocation7], 0
    %s11 = scalar_lea.sflag [#allocation7], 1
    %12 = vsyncpa %s11, 0
    %13 = vsyncpa [#allocation5], 0
    %s14 = scalar_lea.sflag [#allocation5], 1
    %15 = vsyncpa %s14, 0
    loop: start=0, step=1, limit=4
    $region2: #{tpu_custom_call.1} parent=1 // loop_pre_header
      _
    $region3: #{tpu_custom_call.1} parent=1 // loop_header
      %s17 = sphi 0, %s21
      %p18 = scmp.ge.s32.totalorder %s17, 4
      %s24 = sphi 0, %s36
      %s25 = sphi 0, %s32
      %s26 = sphi 0, %s24
      %s27 = sphi 0, %s25
      %s28 = sphi 0, %s26
      %s29 = sphi 0, %s27
      %s41 = sphi 0, %s43
      %s44 = sphi 0, %s41
      %s45 = sphi 0, %s44
      %s61 = sphi 0, %s45
      %s69 = sphi 0, %s71
      %s72 = sphi 0, %s69
      %s73 = sphi 0, %s72
      %s89 = sphi 0, %s73
      %s95 = sphi 0, %s97
      %s98 = sphi 0, %s95
      %s99 = sphi 0, %s98
      %s115 = sphi 0, %s99
    $region4: #{tpu_custom_call.1} parent=1 // loop_header_branch
      %20 = sbr.rel (%p18) target = $region8
    $region5: #{tpu_custom_call.1} parent=1 // loop_body
      %s22 = ssub.s32 %s17, 1
      %s23 = ssub.s32 %s17, 2
      %s30 = sadd.s32 1, %s25
      %p31 = scmp.ge.s32.totalorder %s30, 1
      %s32 = scalar_select %p31, 0, %s30
      %s33 = sadd.s32 1, %s24
      %s34 = scalar_select %p31, %s33, %s24
      %p35 = scmp.ge.s32.totalorder %s34, 2
      %s36 = scalar_select %p35, 0, %s34
      %s37 = ssub.s32 %s25, %s32
      %s38 = ssub.s32 %s24, %s36
      %s39 = sor.u32 %s37, %s38
      %p40 = scmp.eq.s32.totalorder %s39, 0
      %s42 = sadd.s32 %s41, 1
      %s43 = scalar_select %p40, %s41, %s42
      %p46 = pneg %p40
      %p47 = scmp.eq.s32.totalorder %s17, 1
      %p48 = por %p46, %p47
      %p49 = scmp.ne.s32.totalorder %s41, %s44
      %p50 = scmp.eq.s32.totalorder %s17, 0
      %p51 = por %p49, %p50
      %p52 = scmp.ne.s32.totalorder %s41, %s44
      %p53 = scmp.eq.s32.totalorder %s22, 1
      %p54 = por %p52, %p53
      %p55 = scmp.ne.s32.totalorder %s44, %s45
      %p56 = scmp.eq.s32.totalorder %s22, 0
      %p57 = por %p55, %p56
      %p58 = scmp.ne.s32.totalorder %s44, %s45
      %p59 = scmp.eq.s32.totalorder %s23, 1
      %p60 = por %p58, %p59
      %p62 = scmp.ne.s32.totalorder %s45, %s61
      %p63 = scmp.eq.s32.totalorder %s23, 0
      %p64 = por %p62, %p63
      %s65 = ssub.s32 %s25, %s32
      %s66 = ssub.s32 %s24, %s36
      %s67 = sor.u32 %s65, %s66
      %p68 = scmp.eq.s32.totalorder %s67, 0
      %s70 = sadd.s32 %s69, 1
      %s71 = scalar_select %p68, %s69, %s70
      %p74 = pneg %p68
      %p75 = scmp.eq.s32.totalorder %s17, 1
      %p76 = por %p74, %p75
      %p77 = scmp.ne.s32.totalorder %s69, %s72
      %p78 = scmp.eq.s32.totalorder %s17, 0
      %p79 = por %p77, %p78
      %p80 = scmp.ne.s32.totalorder %s69, %s72
      %p81 = scmp.eq.s32.totalorder %s22, 1
      %p82 = por %p80, %p81
      %p83 = scmp.ne.s32.totalorder %s72, %s73
      %p84 = scmp.eq.s32.totalorder %s22, 0
      %p85 = por %p83, %p84
      %p86 = scmp.ne.s32.totalorder %s72, %s73
      %p87 = scmp.eq.s32.totalorder %s23, 1
      %p88 = por %p86, %p87
      %p90 = scmp.ne.s32.totalorder %s73, %s89
      %p91 = scmp.eq.s32.totalorder %s23, 0
      %p92 = por %p90, %p91
      %s93 = ssub.s32 %s24, %s36
      %p94 = scmp.eq.s32.totalorder %s93, 0
      %s96 = sadd.s32 %s95, 1
      %s97 = scalar_select %p94, %s95, %s96
      %p100 = pneg %p94
      %p101 = scmp.eq.s32.totalorder %s17, 1
      %p102 = por %p100, %p101
      %p103 = scmp.ne.s32.totalorder %s95, %s98
      %p104 = scmp.eq.s32.totalorder %s17, 0
      %p105 = por %p103, %p104
      %p106 = scmp.ne.s32.totalorder %s95, %s98
      %p107 = scmp.eq.s32.totalorder %s22, 1
      %p108 = por %p106, %p107
      %p109 = scmp.ne.s32.totalorder %s98, %s99
      %p110 = scmp.eq.s32.totalorder %s22, 0
      %p111 = por %p109, %p110
      %p112 = scmp.ne.s32.totalorder %s98, %s99
      %p113 = scmp.eq.s32.totalorder %s23, 1
      %p114 = por %p112, %p113
      %p116 = scmp.ne.s32.totalorder %s99, %s115
      %p117 = scmp.eq.s32.totalorder %s23, 0
      %p118 = por %p116, %p117
      %p119 = scmp.le.s32.totalorder 1, %s17
      %p120 = scmp.lt.s32.totalorder %s17, 3
      %p121 = pnand %p119, %p120
      %p122 = pneg %p121
      // Predicated region
      $region9: #{tpu_custom_call.1} parent=5 // pred_check
        _
      $region10: #{tpu_custom_call.1} parent=5 // pred_check_branch
        %124 = sbr.rel (%p121) target = $region12
      $region11: #{tpu_custom_call.1} parent=5 // pred_region
        %s125 = ssub.s32 %s17, 1
      $region12: #{tpu_custom_call.1} parent=5 // pred_fallthru
        _
      %p126 = scmp.lt.s32.totalorder %s17, 2
      // Predicated region
      $region13: #{tpu_custom_call.1} parent=5 // pred_check
        %p127 = pneg %p126
      $region14: #{tpu_custom_call.1} parent=5 // pred_check_branch
        %129 = sbr.rel (%p127) target = $region16
      $region15: #{tpu_custom_call.1} parent=5 // pred_region
        // Predicated region
        $region17: #{tpu_custom_call.1} parent=15 // pred_check
          %p130 = pneg %p51
        $region18: #{tpu_custom_call.1} parent=15 // pred_check_branch
          %132 = sbr.rel (%p130) target = $region20
        $region19: #{tpu_custom_call.1} parent=15 // pred_region
          %s133 = sand.u32 %s41, 1
          %s134 = scalar_lea.sflag [#allocation4], %s133
          %s135 = sand.u32 %s41, 1
          %s136 = smul.addr %s135, 8
          %s137 = scalar_lea.vmem [#allocation3], %s136
          %s139 = ssub.s32 128, 128
          %140 = vsyncadd %s134, %s139
          %s141 = smul.addr %s25, 2
          %s142 = sadd.s32 %s24, %s141
          %s143 = smul.addr %s142, 128
          %s144 = scalar_lea.hbm %s0, %s143
          %s146 = sshll.u32 %s137, 4
          %s147 = int_to_ptr.vmem [resolvable:$true] %s146
          %149 = dma.hbm_to_vmem [thread:$0]  %s144, 128, %s147, %s134
        $region20: #{tpu_custom_call.1} parent=15 // pred_fallthru
          _
        // Predicated region
        $region21: #{tpu_custom_call.1} parent=15 // pred_check
          %p150 = pneg %p79
        $region22: #{tpu_custom_call.1} parent=15 // pred_check_branch
          %152 = sbr.rel (%p150) target = $region24
        $region23: #{tpu_custom_call.1} parent=15 // pred_region
          %s153 = sand.u32 %s69, 1
          %s154 = scalar_lea.sflag [#allocation7], %s153
          %s155 = sand.u32 %s69, 1
          %s156 = smul.addr %s155, 8
          %s157 = scalar_lea.vmem [#allocation6], %s156
          %s159 = ssub.s32 128, 128
          %160 = vsyncadd %s154, %s159
          %s161 = smul.addr %s25, 2
          %s162 = sadd.s32 %s24, %s161
          %s163 = smul.addr %s162, 128
          %s164 = scalar_lea.hbm %s1, %s163
          %s166 = sshll.u32 %s157, 4
          %s167 = int_to_ptr.vmem [resolvable:$true] %s166
          %169 = dma.hbm_to_vmem [thread:$0]  %s164, 128, %s167, %s154
        $region24: #{tpu_custom_call.1} parent=15 // pred_fallthru
          _
      $region16: #{tpu_custom_call.1} parent=5 // pred_fallthru
        _
      %p170 = scmp.le.s32.totalorder 1, %s17
      %p171 = scmp.lt.s32.totalorder %s17, 3
      %p172 = pnand %p170, %p171
      %p173 = pneg %p172
      // Predicated region
      $region25: #{tpu_custom_call.1} parent=5 // pred_check
        _
      $region26: #{tpu_custom_call.1} parent=5 // pred_check_branch
        %175 = sbr.rel (%p172) target = $region28
      $region27: #{tpu_custom_call.1} parent=5 // pred_region
        %s176 = ssub.s32 %s17, 1
        %s177 = sand.u32 %s44, 1
        %s178 = scalar_lea.sflag [#allocation4], %s177
        %s179 = sand.u32 %s44, 1
        %s180 = smul.addr %s179, 8
        %s181 = scalar_lea.vmem [#allocation3], %s180
        // Predicated region
        $region29: #{tpu_custom_call.1} parent=27 // pred_check
          %p182 = pneg %p57
        $region30: #{tpu_custom_call.1} parent=27 // pred_check_branch
          %184 = sbr.rel (%p182) target = $region32
        $region31: #{tpu_custom_call.1} parent=27 // pred_region
          %185 = dma.done %s178, 128
        $region32: #{tpu_custom_call.1} parent=27 // pred_fallthru
          _
        %s186 = sand.u32 %s72, 1
        %s187 = scalar_lea.sflag [#allocation7], %s186
        %s188 = sand.u32 %s72, 1
        %s189 = smul.addr %s188, 8
        %s190 = scalar_lea.vmem [#allocation6], %s189
        // Predicated region
        $region33: #{tpu_custom_call.1} parent=27 // pred_check
          %p191 = pneg %p85
        $region34: #{tpu_custom_call.1} parent=27 // pred_check_branch
          %193 = sbr.rel (%p191) target = $region36
        $region35: #{tpu_custom_call.1} parent=27 // pred_region
          %194 = dma.done %s187, 128
        $region36: #{tpu_custom_call.1} parent=27 // pred_fallthru
          _
        %s195 = sand.u32 %s44, 1
        %s196 = scalar_lea.sflag [#allocation4], %s195
        %s197 = sand.u32 %s44, 1
        %s198 = smul.addr %s197, 8
        %s199 = scalar_lea.vmem [#allocation3], %s198
        %p200 = pneg %p57
        %p201 = pneg %p54
        %s202 = sand.u32 %s72, 1
        %s203 = scalar_lea.sflag [#allocation7], %s202
        %s204 = sand.u32 %s72, 1
        %s205 = smul.addr %s204, 8
        %s206 = scalar_lea.vmem [#allocation6], %s205
        %p207 = pneg %p85
        %p208 = pneg %p82
        %p209 = pneg %p111
        %p210 = pneg %p108
        %s211 = sand.u32 %s98, 1
        %s212 = scalar_lea.sflag [#allocation5], %s211
        %s213 = sand.u32 %s98, 1
        %s214 = scalar_lea.vmem [#allocation8], %s213
        %p215 = scmp.eq.s32.totalorder %s27, 0
        // Predicated region
        $region37: #{tpu_custom_call.1} parent=27 // pred_check
          %p216 = pneg %p215
        $region38: #{tpu_custom_call.1} parent=27 // pred_check_branch
          %218 = sbr.rel (%p216) target = $region40
        $region39: #{tpu_custom_call.1} parent=27 // pred_region
          %219 = vst [vmem:[%s214] sm:$0x1] 0.0
          %220 = vst [vmem:[#allocation2] sm:$0x1] 0.0
        $region40: #{tpu_custom_call.1} parent=27 // pred_fallthru
          _
        %v221 = vld [vmem:[%s181] sm:$0xff]
        %v222 = vld [vmem:[%s190] sm:$0xff]
        %vm223 = vcmp.ne.f32.partialorder %v222, %v222
        %v224 = vsub.f32 %v221, %v222
        %v225 = vand.u32 2147483647, %v224
        %v226 = vsel %vm223, 0.0, %v225
        %v227 = vld [vmem:[%s214] sm:$0x1]
        %v228 = vrot.slane %v226, 4
        %v229 = vadd.f32 %v226, %v228
        %v230 = vrot.slane %v229, 2
        %v231 = vadd.f32 %v229, %v230
        %v232 = vrot.slane %v231, 1
        %v233 = vadd.f32 %v231, %v232
        %v234 = vadd.f32 %v227, %v233
        %235 = vst [vmem:[%s214] sm:$0x1] %v234
        %v236 = vld [vmem:[#allocation2] sm:$0x1]
        %v237 = vsel %vm223, 1, 0
        %v238 = vcvt.s32.f32 %v237
        %v239 = vrot.slane %v238, 4
        %v240 = vadd.f32 %v238, %v239
        %v241 = vrot.slane %v240, 2
        %v242 = vadd.f32 %v240, %v241
        %v243 = vrot.slane %v242, 1
        %v244 = vadd.f32 %v242, %v243
        %v245 = vadd.f32 %v236, %v244
        %246 = vst [vmem:[#allocation2] sm:$0x1] %v245
        // Predicated region
        $region41: #{tpu_custom_call.1} parent=27 // pred_check
          %p247 = pneg %p215
        $region42: #{tpu_custom_call.1} parent=27 // pred_check_branch
          %249 = sbr.rel (%p247) target = $region44
        $region43: #{tpu_custom_call.1} parent=27 // pred_region
          %v250 = vld [vmem:[#allocation2] sm:$0x1]
          %v251 = vsub.f32 8.0, %v250
          %v252 = vld [vmem:[%s214] sm:$0x1]
          %v253 = vrcp.pop %v251
          %v254 = vmul.f32 %v252, %v253
          %255 = vst [vmem:[%s214] sm:$0x1] %v254
        $region44: #{tpu_custom_call.1} parent=27 // pred_fallthru
          _
        %s256 = sand.u32 %s98, 1
        %s257 = scalar_lea.sflag [#allocation5], %s256
        %s258 = sand.u32 %s98, 1
        %s259 = scalar_lea.vmem [#allocation8], %s258
        // Predicated region
        $region45: #{tpu_custom_call.1} parent=27 // pred_check
          %p260 = pneg %p108
        $region46: #{tpu_custom_call.1} parent=27 // pred_check_branch
          %262 = sbr.rel (%p260) target = $region48
        $region47: #{tpu_custom_call.1} parent=27 // pred_region
          %s264 = ssub.s32 16, 16
          %265 = vsyncadd %s257, %s264
          %s266 = smul.addr %s26, 16
          %s267 = scalar_lea.hbm %s2, %s266
          %s269 = sshll.u32 %s259, 4
          %s270 = int_to_ptr.vmem [resolvable:$true] %s269
          %272 = dma.vmem_to_hbm [thread:$0]  %s270, 16, %s267, %s257
        $region48: #{tpu_custom_call.1} parent=27 // pred_fallthru
          _
      $region28: #{tpu_custom_call.1} parent=5 // pred_fallthru
        _
      %p273 = scmp.le.s32.totalorder 2, %s17
      // Predicated region
      $region49: #{tpu_custom_call.1} parent=5 // pred_check
        %p274 = pneg %p273
      $region50: #{tpu_custom_call.1} parent=5 // pred_check_branch
        %276 = sbr.rel (%p274) target = $region52
      $region51: #{tpu_custom_call.1} parent=5 // pred_region
        %s277 = ssub.s32 %s17, 2
        // Predicated region
        $region53: #{tpu_custom_call.1} parent=51 // pred_check
          %p278 = pneg %p114
        $region54: #{tpu_custom_call.1} parent=51 // pred_check_branch
          %280 = sbr.rel (%p278) target = $region56
        $region55: #{tpu_custom_call.1} parent=51 // pred_region
          %s281 = sand.u32 %s99, 1
          %s282 = scalar_lea.sflag [#allocation5], %s281
          %s283 = sand.u32 %s99, 1
          %s284 = scalar_lea.vmem [#allocation8], %s283
          %285 = dma.done %s282, 16
        $region56: #{tpu_custom_call.1} parent=51 // pred_fallthru
          _
      $region52: #{tpu_custom_call.1} parent=5 // pred_fallthru
        _
    $region6: #{tpu_custom_call.1} parent=1 // loop_footer
      %s21 = sadd.s32 1, %s17
    $region7: #{tpu_custom_call.1} parent=1 // loop_footer_branch
      %16 = sbr.rel target = $region3
    $region8: #{tpu_custom_call.1} parent=1 // loop_exit
      _
    %286 = vsyncpa [#allocation4], 1
    %s287 = scalar_lea.sflag [#allocation4], 1
    %288 = vsyncpa %s287, 1
    %289 = vsyncpa [#allocation7], 1
    %s290 = scalar_lea.sflag [#allocation7], 1
    %291 = vsyncpa %s290, 1
    %292 = vsyncpa [#allocation5], 1
    %s293 = scalar_lea.sflag [#allocation5], 1
    %294 = vsyncpa %s293, 1

</llo_original>
